<compile_context>
chip_gen: v6e
topology: v6e:2x2x1
jax: 0.10.0
libtpu: 0.0.40
codegen_flags: <defaults>
</compile_context>

<pallas_src>
import jax
import jax.numpy as jnp
import numpy as np
from jax.experimental import pallas as pl
from jax.experimental.pallas import tpu as pltpu

# ----------------------------- configuration --------------------------------
C_IN = 3                                   # RGB image channels
C_FEAT = 32                                # backbone feature channels
N_CLS = 8                                  # number of semantic classes
C_OFF = 2                                  # offset head channels (dy, dx)
C_HEADS = N_CLS + 1 + C_OFF + 1            # 12: [sem | center | offset | depth]
C_OUT = N_CLS + N_CLS + 1 + C_OFF + 1      # 20: [sem | softmax | center | offset | depth]
TILE_P_MAX = 4096                          # pixels per grid step (lane axis)


def _choose_tile_p(p):
    """Largest tile (<= TILE_P_MAX, multiple of 128, divides p), preferring grid >= 2."""
    candidates = [4096, 2048, 1024, 512, 256, 128]
    for t in candidates:
        if p % t == 0 and p // t >= 2:
            return t
    for t in candidates:
        if p % t == 0:
            return t
    raise ValueError("N*H*W must be a multiple of 128 for this demo")


# ------------------------------- Pallas kernel ------------------------------
def _panoptic_kernel(x_ref, wbb_ref, bbb_ref, wh_ref, bh_ref, out_ref):
    # x: (C_IN, TILE_P), channel-major; normalization is pre-folded into wbb/bbb.
    x = x_ref[...].astype(jnp.float32)

    # ---- backbone: 1x1 conv (channel matmul) + ReLU ----
    feat = jnp.dot(wbb_ref[...], x, preferred_element_type=jnp.float32) + bbb_ref[...]
    feat = jnp.maximum(feat, 0.0)                            # (C_FEAT, TILE_P)

    # ---- fused heads: [sem(8) | center(1) | offset(2) | depth(1)] ----
    heads = jnp.dot(wh_ref[...], feat, preferred_element_type=jnp.float32) + bh_ref[...]

    # ---- softmax over the class axis (matches F.softmax(r, dim=0)) ----
    sem = heads[:N_CLS, :]                                   # (N_CLS, TILE_P)
    m = jnp.max(sem, axis=0, keepdims=True)
    e = jnp.exp(sem - m)
    denom = jnp.sum(e, axis=0, keepdims=True)
    prob = e * pl.reciprocal(denom, approx=False)

    # ---- single fused, lane-dense output slab ----
    out_ref[...] = jnp.concatenate([sem, prob, heads[N_CLS:, :]], axis=0)


# ------------------------------ Python wrapper -------------------------------
@jax.jit
def panoptic_deeplab_forward(x_nchw, params):
    """x_nchw: (N, C_IN, H, W) float32 image batch (PyTorch convention)."""
    n, c, h, w = x_nchw.shape
    assert c == C_IN
    p = n * h * w
    tile_p = _choose_tile_p(p)

    # NCHW -> channel-major (C, P); only an N<->C axis swap, no HWC shuffle.
    x_cm = jnp.transpose(x_nchw, (1, 0, 2, 3)).reshape(C_IN, p)

    # ---- fold pixel normalization into backbone weights (f32) ----
    inv_std = 1.0 / params["pixel_std"]                             # (1, C_IN)
    w_bb_folded = params["w_bb"] * inv_std.T                        # (C_IN, C_FEAT)
    b_bb_folded = params["b_bb"] - (params["pixel_mean"] * inv_std) @ params["w_bb"]
    w_bb_cm = w_bb_folded.T                                         # (C_FEAT, C_IN)
    b_bb_cm = b_bb_folded.T                                         # (C_FEAT, 1)

    # ---- fuse the four head weight matrices / biases ----
    w_heads_cm = jnp.concatenate(
        [params["w_sem"], params["w_ctr"], params["w_off"], params["w_dep"]], axis=1
    ).T                                                             # (C_HEADS, C_FEAT)
    b_heads_cm = jnp.concatenate(
        [params["b_sem"], params["b_ctr"], params["b_off"], params["b_dep"]], axis=1
    ).T                                                             # (C_HEADS, 1)

    grid = (p // tile_p,)

    slab = pl.pallas_call(
        _panoptic_kernel,
        out_shape=jax.ShapeDtypeStruct((C_OUT, p), jnp.float32),
        grid_spec=pltpu.PrefetchScalarGridSpec(
            num_scalar_prefetch=0,
            grid=grid,
            in_specs=[
                pl.BlockSpec((C_IN, tile_p), lambda i: (0, i)),      # x (channel-major)
                pl.BlockSpec((C_FEAT, C_IN), lambda i: (0, 0)),      # W backbone (folded)
                pl.BlockSpec((C_FEAT, 1), lambda i: (0, 0)),         # b backbone (folded)
                pl.BlockSpec((C_HEADS, C_FEAT), lambda i: (0, 0)),   # W heads (fused)
                pl.BlockSpec((C_HEADS, 1), lambda i: (0, 0)),        # b heads (fused)
            ],
            out_specs=pl.BlockSpec((C_OUT, tile_p), lambda i: (0, i)),
        ),
        compiler_params=pltpu.CompilerParams(
            dimension_semantics=("parallel",),
        ),
    )(x_cm, w_bb_cm, b_bb_cm, w_heads_cm, b_heads_cm)

    # ---- split the fused slab and convert (C, P) -> NCHW ----
    sem_cm = slab[0:N_CLS]
    prob_cm = slab[N_CLS:2 * N_CLS]
    ctr_cm = slab[2 * N_CLS:2 * N_CLS + 1]
    off_cm = slab[2 * N_CLS + 1:2 * N_CLS + 1 + C_OFF]
    dep_cm = slab[2 * N_CLS + 1 + C_OFF:]

    # argmax over the class axis (matches r.argmax(dim=0, keepdim=True)); done
    # in the wrapper so the kernel has no 1-lane int32 store stream.
    arg_cm = jnp.argmax(sem_cm, axis=0)[None, :].astype(jnp.int32)   # (1, P)

    def to_nchw(t_cm):
        cdim = t_cm.shape[0]
        return jnp.transpose(t_cm.reshape(cdim, n, h, w), (1, 0, 2, 3))

    return {
        "sem_seg": to_nchw(sem_cm),       # per-image logits, like sem_seg_results
        "sem_prob": to_nchw(prob_cm),     # F.softmax(r, dim=0)
        "sem_argmax": to_nchw(arg_cm),    # r.argmax(dim=0, keepdim=True)
        "center": to_nchw(ctr_cm),        # center heatmap
        "offset": to_nchw(off_cm),        # pixel offsets
        "depth": to_nchw(dep_cm),         # depth prediction
    }


# ------------------------ deterministic parameter init -----------------------
def init_params(key):
    ks = jax.random.split(key, 6)
    params = {
        # pixel_mean / pixel_std buffers (cfg.MODEL.PIXEL_MEAN / PIXEL_STD)
        "pixel_mean": jnp.array([[123.675, 116.28, 103.53]], jnp.float32),
        "pixel_std": jnp.array([[58.395, 57.12, 57.375]], jnp.float32),
        "w_bb": 0.1 * jax.random.normal(ks[0], (C_IN, C_FEAT), jnp.float32),
        "b_bb": jnp.zeros((1, C_FEAT), jnp.float32),
        "w_sem": 0.1 * jax.random.normal(ks[1], (C_FEAT, N_CLS), jnp.float32),
        "b_sem": jnp.zeros((1, N_CLS), jnp.float32),
        "w_ctr": 0.1 * jax.random.normal(ks[2], (C_FEAT, 1), jnp.float32),
        "b_ctr": jnp.zeros((1, 1), jnp.float32),
        "w_off": 0.1 * jax.random.normal(ks[3], (C_FEAT, C_OFF), jnp.float32),
        "b_off": jnp.zeros((1, C_OFF), jnp.float32),
        "w_dep": 0.1 * jax.random.normal(ks[4], (C_FEAT, 1), jnp.float32),
        "b_dep": jnp.zeros((1, 1), jnp.float32),
    }
    return params


# ------------------------------ pure-JAX reference ---------------------------
def reference_forward(x_nchw, params):
    n, c, h, w = x_nchw.shape
    x = jnp.transpose(x_nchw, (0, 2, 3, 1)).reshape(-1, C_IN)
    xn = (x - params["pixel_mean"]) / params["pixel_std"]
    feat = jnp.maximum(xn @ params["w_bb"] + params["b_bb"], 0.0)
    sem = feat @ params["w_sem"] + params["b_sem"]
    prob = jax.nn.softmax(sem, axis=-1)
    arg = jnp.argmax(sem, axis=-1, keepdims=True).astype(jnp.int32)
    ctr = feat @ params["w_ctr"] + params["b_ctr"]
    off = feat @ params["w_off"] + params["b_off"]
    dep = feat @ params["w_dep"] + params["b_dep"]

    def to_nchw(t, cdim):
        return jnp.transpose(t.reshape(n, h, w, cdim), (0, 3, 1, 2))

    return {
        "sem_seg": to_nchw(sem, N_CLS),
        "sem_prob": to_nchw(prob, N_CLS),
        "sem_argmax": to_nchw(arg, 1),
        "center": to_nchw(ctr, 1),
        "offset": to_nchw(off, C_OFF),
        "depth": to_nchw(dep, 1),
    }


if __name__ == "__main__":
    key = jax.random.PRNGKey(0)
    k_img, k_par = jax.random.split(key)

    # batched_inputs -> images: batch of 2 RGB images, 16x16, values in [0, 255]
    x = jax.random.uniform(k_img, (2, C_IN, 16, 16), jnp.float32, 0.0, 255.0)
    params = init_params(k_par)

    out = panoptic_deeplab_forward(x, params)
    jax.block_until_ready(out)

    ref = reference_forward(x, params)
    for name in ("sem_seg", "sem_prob", "center", "offset", "depth"):
        np.testing.assert_allclose(
            np.asarray(out[name]), np.asarray(ref[name]), rtol=1e-4, atol=1e-4
        )
    np.testing.assert_array_equal(
        np.asarray(out["sem_argmax"]), np.asarray(ref["sem_argmax"])
    )

    print("KERNEL_OK")
</pallas_src>

<mosaic_0001>
module attributes {stable_mosaic.version = 11 : i64} {
  func.func @_panoptic_kernel(%arg0: i32, %arg1: memref<3x256xf32, #tpu.memory_space<vmem>>, %arg2: memref<32x3xf32, #tpu.memory_space<vmem>>, %arg3: memref<32x1xf32, #tpu.memory_space<vmem>>, %arg4: memref<12x32xf32, #tpu.memory_space<vmem>>, %arg5: memref<12x1xf32, #tpu.memory_space<vmem>>, %arg6: memref<20x256xf32, #tpu.memory_space<vmem>>) attributes {dimension_semantics = [#tpu.dimension_semantics<parallel>], iteration_bounds = array<i64: 2>, scalar_prefetch = 0 : i64, scratch_operands = 0 : i64, tpu.core_type = #tpu.core_type<tc>, window_params = [{transform_indices = @transform_0, window_bounds = array<i64: 3, 256>}, {pipeline_mode = #tpu.pipeline_mode<synchronous>, transform_indices = @transform_1, window_bounds = array<i64: 32, 3>}, {pipeline_mode = #tpu.pipeline_mode<synchronous>, transform_indices = @transform_2, window_bounds = array<i64: 32, 1>}, {pipeline_mode = #tpu.pipeline_mode<synchronous>, transform_indices = @transform_3, window_bounds = array<i64: 12, 32>}, {pipeline_mode = #tpu.pipeline_mode<synchronous>, transform_indices = @transform_4, window_bounds = array<i64: 12, 1>}, {transform_indices = @transform_5, window_bounds = array<i64: 20, 256>}]} {
    %c0 = arith.constant 0 : index
    %c0_0 = arith.constant 0 : index
    %0 = vector.load %arg1[%c0, %c0_0] : memref<3x256xf32, #tpu.memory_space<vmem>>, vector<3x256xf32>
    %c0_1 = arith.constant 0 : index
    %c0_2 = arith.constant 0 : index
    %1 = vector.load %arg2[%c0_1, %c0_2] : memref<32x3xf32, #tpu.memory_space<vmem>>, vector<32x3xf32>
    %cst = arith.constant dense<0.000000e+00> : vector<32x256xf32>
    %2 = tpu.matmul %1, %0, %cst {dimension_numbers = #tpu.dot_dimension_numbers<[1], [0], [0], [1], [0, 0, 1, 1], [], []>} : vector<32x3xf32>, vector<3x256xf32>, vector<32x256xf32> -> vector<32x256xf32>
    %c0_3 = arith.constant 0 : index
    %c0_4 = arith.constant 0 : index
    %3 = vector.load %arg3[%c0_3, %c0_4] : memref<32x1xf32, #tpu.memory_space<vmem>>, vector<32x1xf32>
    %4 = vector.broadcast %3 : vector<32x1xf32> to vector<32x256xf32>
    %5 = arith.addf %2, %4 : vector<32x256xf32>
    %cst_5 = arith.constant 0.000000e+00 : f32
    %6 = vector.broadcast %cst_5 : f32 to vector<32x256xf32>
    %7 = arith.maximumf %5, %6 : vector<32x256xf32>
    %c0_6 = arith.constant 0 : index
    %c0_7 = arith.constant 0 : index
    %8 = vector.load %arg4[%c0_6, %c0_7] : memref<12x32xf32, #tpu.memory_space<vmem>>, vector<12x32xf32>
    %cst_8 = arith.constant dense<0.000000e+00> : vector<12x256xf32>
    %9 = tpu.matmul %8, %7, %cst_8 {dimension_numbers = #tpu.dot_dimension_numbers<[1], [0], [0], [1], [0, 0, 1, 1], [], []>} : vector<12x32xf32>, vector<32x256xf32>, vector<12x256xf32> -> vector<12x256xf32>
    %c0_9 = arith.constant 0 : index
    %c0_10 = arith.constant 0 : index
    %10 = vector.load %arg5[%c0_9, %c0_10] : memref<12x1xf32, #tpu.memory_space<vmem>>, vector<12x1xf32>
    %11 = vector.broadcast %10 : vector<12x1xf32> to vector<12x256xf32>
    %12 = arith.addf %9, %11 : vector<12x256xf32>
    %13 = vector.extract_strided_slice %12 {offsets = [0, 0], sizes = [8, 256], strides = [1, 1]} : vector<12x256xf32> to vector<8x256xf32>
    %cst_11 = arith.constant dense<0xFF800000> : vector<256xf32>
    %14 = vector.multi_reduction <maximumf>, %13, %cst_11 [0] : vector<8x256xf32> to vector<256xf32>
    %15 = vector.shape_cast %14 : vector<256xf32> to vector<1x256xf32>
    %16 = vector.broadcast %15 : vector<1x256xf32> to vector<8x256xf32>
    %17 = arith.subf %13, %16 : vector<8x256xf32>
    %18 = math.exp %17 : vector<8x256xf32>
    %cst_12 = arith.constant dense<0.000000e+00> : vector<256xf32>
    %19 = vector.multi_reduction <add>, %18, %cst_12 [0] : vector<8x256xf32> to vector<256xf32>
    %20 = vector.shape_cast %19 : vector<256xf32> to vector<1x256xf32>
    %21 = tpu.reciprocal %20 : vector<1x256xf32> -> vector<1x256xf32>
    %22 = vector.broadcast %21 : vector<1x256xf32> to vector<8x256xf32>
    %23 = arith.mulf %18, %22 : vector<8x256xf32>
    %24 = vector.extract_strided_slice %12 {offsets = [8, 0], sizes = [4, 256], strides = [1, 1]} : vector<12x256xf32> to vector<4x256xf32>
    %25 = tpu.concatenate %13, %23, %24 in 0 : vector<8x256xf32>, vector<8x256xf32>, vector<4x256xf32> -> vector<20x256xf32>
    %c0_13 = arith.constant 0 : index
    %c0_14 = arith.constant 0 : index
    %26 = vector.load %arg6[%c0_13, %c0_14] : memref<20x256xf32, #tpu.memory_space<vmem>>, vector<20x256xf32>
    tpu.vector_store %arg6[%c0_13, %c0_14], %25 {strides = array<i32>} : memref<20x256xf32, #tpu.memory_space<vmem>>, vector<20x256xf32>,
    return
  }
  func.func @transform_0(%arg0: i32) -> (i32, i32) {
    %c0_i32 = arith.constant 0 : i32
    %c0_i32_0 = arith.constant 0 : i32
    return %c0_i32, %arg0 : i32, i32
  }
  func.func @transform_1(%arg0: i32) -> (i32, i32) {
    %c0_i32 = arith.constant 0 : i32
    %c0_i32_0 = arith.constant 0 : i32
    %c0_i32_1 = arith.constant 0 : i32
    return %c0_i32, %c0_i32_0 : i32, i32
  }
  func.func @transform_2(%arg0: i32) -> (i32, i32) {
    %c0_i32 = arith.constant 0 : i32
    %c0_i32_0 = arith.constant 0 : i32
    %c0_i32_1 = arith.constant 0 : i32
    return %c0_i32, %c0_i32_0 : i32, i32
  }
  func.func @transform_3(%arg0: i32) -> (i32, i32) {
    %c0_i32 = arith.constant 0 : i32
    %c0_i32_0 = arith.constant 0 : i32
    %c0_i32_1 = arith.constant 0 : i32
    return %c0_i32, %c0_i32_0 : i32, i32
  }
  func.func @transform_4(%arg0: i32) -> (i32, i32) {
    %c0_i32 = arith.constant 0 : i32
    %c0_i32_0 = arith.constant 0 : i32
    %c0_i32_1 = arith.constant 0 : i32
    return %c0_i32, %c0_i32_0 : i32, i32
  }
  func.func @transform_5(%arg0: i32) -> (i32, i32) {
    %c0_i32 = arith.constant 0 : i32
    %c0_i32_0 = arith.constant 0 : i32
    return %c0_i32, %arg0 : i32, i32
  }
}

</mosaic_0001>

<llo_original>
// kernel: panoptic_deeplab_forward.1
$region0: #{panoptic_deeplab_forward.1}
  #allocation0 [shape = 'u32[]', space=smem, size = 0x4, offset = 0x4, fixed_abs, tag = 'smem constant byte address 0x4 - core index']
  #allocation1 [shape = 'u32[144,128]{1,0:T(1,128)}', space=vmem, size = 0x12000, scoped, tag = 'internal scratch']
  %s0 = inlined_call_operand.vmem [shape: f32[3,512], index: 0, kind: input, shape index: {}]
  %s1 = inlined_call_operand.vmem [shape: f32[32,3], index: 1, kind: input, shape index: {}]
  %s2 = inlined_call_operand.vmem [shape: f32[32,1], index: 2, kind: input, shape index: {}]
  %s3 = inlined_call_operand.vmem [shape: f32[12,32], index: 3, kind: input, shape index: {}]
  %s4 = inlined_call_operand.vmem [shape: f32[12,1], index: 4, kind: input, shape index: {}]
  %s5 = inlined_call_operand.vmem [shape: f32[20,512], index: 5, kind: output, shape index: {}]
  %s6 = sld [smem:[#allocation0]]
  $region72: #{panoptic_deeplab_forward.1} parent=0
    _
  %s8 = ssub.s32 1, %s6
  %s9 = scalar_select 0, %s8, %s6
  $region1: #{panoptic_deeplab_forward.1} parent=0
    #allocation2 [shape = 'u8[49152]{0}', space=vmem, size = 0xc000, scoped, tag = 'output window, operand 0']
    loop: start=0, step=1, limit=4
    $region2: #{panoptic_deeplab_forward.1} parent=1 // loop_pre_header
      _
    $region3: #{panoptic_deeplab_forward.1} parent=1 // loop_header
      %s11 = sphi 0, %s15
      %p12 = scmp.ge.s32.totalorder %s11, 4
      %s21 = sphi 0, %s23
      %s24 = sphi 0, %s21
      %s25 = sphi 0, %s24
      %s41 = sphi 0, %s25
      %s45 = sphi 0, %s45
      %s47 = sphi 0, %s45
      %s48 = sphi 0, %s47
      %s62 = sphi 0, %s48
      %s66 = sphi 0, %s66
      %s68 = sphi 0, %s66
      %s69 = sphi 0, %s68
      %s83 = sphi 0, %s69
      %s87 = sphi 0, %s87
      %s89 = sphi 0, %s87
      %s90 = sphi 0, %s89
      %s104 = sphi 0, %s90
      %s108 = sphi 0, %s108
      %s110 = sphi 0, %s108
      %s111 = sphi 0, %s110
      %s125 = sphi 0, %s111
      %s131 = sphi 0, %s133
      %s134 = sphi 0, %s131
      %s135 = sphi 0, %s134
      %s151 = sphi 0, %s135
    $region4: #{panoptic_deeplab_forward.1} parent=1 // loop_header_branch
      %14 = sbr.rel (%p12) target = $region8
    $region5: #{panoptic_deeplab_forward.1} parent=1 // loop_body
      %s16 = ssub.s32 %s11, 1
      %s17 = ssub.s32 %s11, 2
      %s18 = sadd.s32 %s11, 1
      %s19 = ssub.s32 %s11, %s18
      %p20 = scmp.eq.s32.totalorder %s19, 0
      %s22 = sadd.s32 %s21, 1
      %s23 = scalar_select %p20, %s21, %s22
      %p26 = pneg %p20
      %p27 = scmp.eq.s32.totalorder %s11, 1
      %p28 = por %p26, %p27
      %p29 = scmp.ne.s32.totalorder %s21, %s24
      %p30 = scmp.eq.s32.totalorder %s11, 0
      %p31 = por %p29, %p30
      %p32 = scmp.ne.s32.totalorder %s21, %s24
      %p33 = scmp.eq.s32.totalorder %s16, 1
      %p34 = por %p32, %p33
      %p35 = scmp.ne.s32.totalorder %s24, %s25
      %p36 = scmp.eq.s32.totalorder %s16, 0
      %p37 = por %p35, %p36
      %p38 = scmp.ne.s32.totalorder %s24, %s25
      %p39 = scmp.eq.s32.totalorder %s17, 1
      %p40 = por %p38, %p39
      %p42 = scmp.ne.s32.totalorder %s25, %s41
      %p43 = scmp.eq.s32.totalorder %s17, 0
      %p44 = por %p42, %p43
      %s46 = sadd.s32 %s45, 1
      %p49 = scmp.eq.s32.totalorder %s11, 1
      %p50 = scmp.ne.s32.totalorder %s45, %s47
      %p51 = scmp.eq.s32.totalorder %s11, 0
      %p52 = por %p50, %p51
      %p53 = scmp.ne.s32.totalorder %s45, %s47
      %p54 = scmp.eq.s32.totalorder %s16, 1
      %p55 = por %p53, %p54
      %p56 = scmp.ne.s32.totalorder %s47, %s48
      %p57 = scmp.eq.s32.totalorder %s16, 0
      %p58 = por %p56, %p57
      %p59 = scmp.ne.s32.totalorder %s47, %s48
      %p60 = scmp.eq.s32.totalorder %s17, 1
      %p61 = por %p59, %p60
      %p63 = scmp.ne.s32.totalorder %s48, %s62
      %p64 = scmp.eq.s32.totalorder %s17, 0
      %p65 = por %p63, %p64
      %s67 = sadd.s32 %s66, 1
      %p70 = scmp.eq.s32.totalorder %s11, 1
      %p71 = scmp.ne.s32.totalorder %s66, %s68
      %p72 = scmp.eq.s32.totalorder %s11, 0
      %p73 = por %p71, %p72
      %p74 = scmp.ne.s32.totalorder %s66, %s68
      %p75 = scmp.eq.s32.totalorder %s16, 1
      %p76 = por %p74, %p75
      %p77 = scmp.ne.s32.totalorder %s68, %s69
      %p78 = scmp.eq.s32.totalorder %s16, 0
      %p79 = por %p77, %p78
      %p80 = scmp.ne.s32.totalorder %s68, %s69
      %p81 = scmp.eq.s32.totalorder %s17, 1
      %p82 = por %p80, %p81
      %p84 = scmp.ne.s32.totalorder %s69, %s83
      %p85 = scmp.eq.s32.totalorder %s17, 0
      %p86 = por %p84, %p85
      %s88 = sadd.s32 %s87, 1
      %p91 = scmp.eq.s32.totalorder %s11, 1
      %p92 = scmp.ne.s32.totalorder %s87, %s89
      %p93 = scmp.eq.s32.totalorder %s11, 0
      %p94 = por %p92, %p93
      %p95 = scmp.ne.s32.totalorder %s87, %s89
      %p96 = scmp.eq.s32.totalorder %s16, 1
      %p97 = por %p95, %p96
      %p98 = scmp.ne.s32.totalorder %s89, %s90
      %p99 = scmp.eq.s32.totalorder %s16, 0
      %p100 = por %p98, %p99
      %p101 = scmp.ne.s32.totalorder %s89, %s90
      %p102 = scmp.eq.s32.totalorder %s17, 1
      %p103 = por %p101, %p102
      %p105 = scmp.ne.s32.totalorder %s90, %s104
      %p106 = scmp.eq.s32.totalorder %s17, 0
      %p107 = por %p105, %p106
      %s109 = sadd.s32 %s108, 1
      %p112 = scmp.eq.s32.totalorder %s11, 1
      %p113 = scmp.ne.s32.totalorder %s108, %s110
      %p114 = scmp.eq.s32.totalorder %s11, 0
      %p115 = por %p113, %p114
      %p116 = scmp.ne.s32.totalorder %s108, %s110
      %p117 = scmp.eq.s32.totalorder %s16, 1
      %p118 = por %p116, %p117
      %p119 = scmp.ne.s32.totalorder %s110, %s111
      %p120 = scmp.eq.s32.totalorder %s16, 0
      %p121 = por %p119, %p120
      %p122 = scmp.ne.s32.totalorder %s110, %s111
      %p123 = scmp.eq.s32.totalorder %s17, 1
      %p124 = por %p122, %p123
      %p126 = scmp.ne.s32.totalorder %s111, %s125
      %p127 = scmp.eq.s32.totalorder %s17, 0
      %p128 = por %p126, %p127
      %s129 = ssub.s32 %s11, %s18
      %p130 = scmp.eq.s32.totalorder %s129, 0
      %s132 = sadd.s32 %s131, 1
      %s133 = scalar_select %p130, %s131, %s132
      %p136 = pneg %p130
      %p137 = scmp.eq.s32.totalorder %s11, 1
      %p138 = por %p136, %p137
      %p139 = scmp.ne.s32.totalorder %s131, %s134
      %p140 = scmp.eq.s32.totalorder %s11, 0
      %p141 = por %p139, %p140
      %p142 = scmp.ne.s32.totalorder %s131, %s134
      %p143 = scmp.eq.s32.totalorder %s16, 1
      %p144 = por %p142, %p143
      %p145 = scmp.ne.s32.totalorder %s134, %s135
      %p146 = scmp.eq.s32.totalorder %s16, 0
      %p147 = por %p145, %p146
      %p148 = scmp.ne.s32.totalorder %s134, %s135
      %p149 = scmp.eq.s32.totalorder %s17, 1
      %p150 = por %p148, %p149
      %p152 = scmp.ne.s32.totalorder %s135, %s151
      %p153 = scmp.eq.s32.totalorder %s17, 0
      %p154 = por %p152, %p153
      %p155 = scmp.le.s32.totalorder 1, %s11
      %p156 = scmp.lt.s32.totalorder %s11, 3
      %p157 = pnand %p155, %p156
      %p158 = pneg %p157
      // Predicated region
      $region9: #{panoptic_deeplab_forward.1} parent=5 // pred_check
        _
      $region10: #{panoptic_deeplab_forward.1} parent=5 // pred_check_branch
        %160 = sbr.rel (%p157) target = $region12
      $region11: #{panoptic_deeplab_forward.1} parent=5 // pred_region
        %s161 = ssub.s32 %s11, 1
        // Predicated region
        $region13: #{panoptic_deeplab_forward.1} parent=11 // pred_check
          %p162 = pneg %p58
        $region14: #{panoptic_deeplab_forward.1} parent=11 // pred_check_branch
          %164 = sbr.rel (%p162) target = $region16
        $region15: #{panoptic_deeplab_forward.1} parent=11 // pred_region
          _
        $region16: #{panoptic_deeplab_forward.1} parent=11 // pred_fallthru
          _
        // Predicated region
        $region17: #{panoptic_deeplab_forward.1} parent=11 // pred_check
          %p165 = pneg %p79
        $region18: #{panoptic_deeplab_forward.1} parent=11 // pred_check_branch
          %167 = sbr.rel (%p165) target = $region20
        $region19: #{panoptic_deeplab_forward.1} parent=11 // pred_region
          _
        $region20: #{panoptic_deeplab_forward.1} parent=11 // pred_fallthru
          _
        // Predicated region
        $region21: #{panoptic_deeplab_forward.1} parent=11 // pred_check
          %p168 = pneg %p100
        $region22: #{panoptic_deeplab_forward.1} parent=11 // pred_check_branch
          %170 = sbr.rel (%p168) target = $region24
        $region23: #{panoptic_deeplab_forward.1} parent=11 // pred_region
          _
        $region24: #{panoptic_deeplab_forward.1} parent=11 // pred_fallthru
          _
        // Predicated region
        $region25: #{panoptic_deeplab_forward.1} parent=11 // pred_check
          %p171 = pneg %p121
        $region26: #{panoptic_deeplab_forward.1} parent=11 // pred_check_branch
          %173 = sbr.rel (%p171) target = $region28
        $region27: #{panoptic_deeplab_forward.1} parent=11 // pred_region
          _
        $region28: #{panoptic_deeplab_forward.1} parent=11 // pred_fallthru
          _
      $region12: #{panoptic_deeplab_forward.1} parent=5 // pred_fallthru
        _
      %p174 = scmp.lt.s32.totalorder %s11, 2
      // Predicated region
      $region29: #{panoptic_deeplab_forward.1} parent=5 // pred_check
        %p175 = pneg %p174
      $region30: #{panoptic_deeplab_forward.1} parent=5 // pred_check_branch
        %177 = sbr.rel (%p175) target = $region32
      $region31: #{panoptic_deeplab_forward.1} parent=5 // pred_region
        // Predicated region
        $region33: #{panoptic_deeplab_forward.1} parent=31 // pred_check
          %p178 = pneg %p31
        $region34: #{panoptic_deeplab_forward.1} parent=31 // pred_check_branch
          %180 = sbr.rel (%p178) target = $region36
        $region35: #{panoptic_deeplab_forward.1} parent=31 // pred_region
          %s181 = smul.u32 2, %s11
          %p182 = scmp.lt.s32.totalorder %s181, 3
          %s183 = scalar_select %p182, %s181, 3
          %s184 = smul.addr %s183, 4
          %s185 = scalar_lea.vmem %s0, %s184
          %s186 = smul.u32 2, %s11
        $region36: #{panoptic_deeplab_forward.1} parent=31 // pred_fallthru
          _
      $region32: #{panoptic_deeplab_forward.1} parent=5 // pred_fallthru
        _
      %p187 = scmp.le.s32.totalorder 1, %s11
      %p188 = scmp.lt.s32.totalorder %s11, 3
      %p189 = pnand %p187, %p188
      %p190 = pneg %p189
      // Predicated region
      $region37: #{panoptic_deeplab_forward.1} parent=5 // pred_check
        _
      $region38: #{panoptic_deeplab_forward.1} parent=5 // pred_check_branch
        %192 = sbr.rel (%p189) target = $region40
      $region39: #{panoptic_deeplab_forward.1} parent=5 // pred_region
        %s193 = ssub.s32 %s11, 1
        %s194 = smul.u32 2, %s16
        %p195 = scmp.lt.s32.totalorder %s194, 3
        %s196 = scalar_select %p195, %s194, 3
        %s197 = smul.addr %s196, 4
        %s198 = scalar_lea.vmem %s0, %s197
        %p199 = pneg %p37
        %p200 = pneg %p34
        %p201 = pneg %p58
        %p202 = pneg %p55
        %p203 = pneg %p79
        %p204 = pneg %p76
        %p205 = pneg %p100
        %p206 = pneg %p97
        %p207 = pneg %p121
        %p208 = pneg %p118
        %p209 = pneg %p147
        %p210 = pneg %p144
        %s211 = sand.u32 %s134, 1
        %s212 = sand.u32 %s134, 1
        %s213 = smul.addr %s212, 48
        %s214 = scalar_lea.vmem [#allocation2], %s213
        %s215 = smul.u32 2, %s16
        %p216 = scmp.lt.s32.totalorder %s215, 3
        %s217 = scalar_select %p216, %s215, 3
        %s218 = smul.addr %s217, 4
        %s219 = scalar_lea.vmem %s0, %s218
        %s220 = smul.u32 2, %s16
        %s221 = smul.u32 2, %s16
        %v222 = vld [vmem:[%s219] sm:$0x77]
        %v223 = vld [vmem:[%s1] sm:$0xff]
        %v224 = vld [vmem:[%s1 + $0x8] sm:$0xff]
        %v225 = vld [vmem:[%s1 + $0x10] sm:$0xff]
        %v226 = vld [vmem:[%s1 + $0x18] sm:$0xff]
        %v227 = vld [vmem:[%s2] sm:$0xff]
        %v228 = vld [vmem:[%s2 + $0x8] sm:$0xff]
        %v229 = vld [vmem:[%s2 + $0x10] sm:$0xff]
        %v230 = vld [vmem:[%s2 + $0x18] sm:$0xff]
        %232 = vset.pattern.permute.xlu0 0
        %233 = vperm.xlu0 %232, %v227
        %v234 = vpop.permute.xlu0 %233
        %237 = vset.pattern.permute.xlu0 0
        %238 = vperm.xlu0 %237, %v228
        %v239 = vpop.permute.xlu0 %238
        %242 = vset.pattern.permute.xlu0 0
        %243 = vperm.xlu0 %242, %v229
        %v244 = vpop.permute.xlu0 %243
        %247 = vset.pattern.permute.xlu0 0
        %248 = vperm.xlu0 %247, %v230
        %v249 = vpop.permute.xlu0 %248
        %v252 = vcombine.high %v222, %v222
        %vm253 = vcmask 23552
        %v255 = vsel %vm253, %v223, 0
        %v258 = vsel %vm253, %v224, 0
        %v261 = vsel %vm253, %v225, 0
        %v264 = vsel %vm253, %v226, 0
        %vm266 = vcmask 1042432
        %v267 = vsel %vm266, %v222, 0
        %v269 = vsel %vm266, %v252, 0
        %271 = vmatprep.subr.mxu0 0.0
        %272 = vmatpush1.msra.mxu0 0.0
        %273 = vmatprep.subr.mxu0 0.0
        %274 = vmatpush1.msra.mxu0 0.0
        %275 = vmatprep.subr.mxu0 0.0
        %276 = vmatpush1.msra.mxu0 0.0
        %277 = vmatprep.subr.mxu0 0.0
        %278 = vmatpush1.msra.mxu0 0.0
        %279 = vmatprep.subr.mxu0 0.0
        %280 = vmatpush1.msra.mxu0 0.0
        %281 = vmatprep.subr.mxu0 0.0
        %282 = vmatpush1.msra.mxu0 0.0
        %283 = vmatprep.subr.mxu0 0.0
        %284 = vmatpush1.msra.mxu0 0.0
        %285 = vmatprep.subr.mxu0 0.0
        %286 = vmatpush1.msra.mxu0 0.0
        %287 = vmatprep.subr.mxu0 0.0
        %288 = vmatpush1.msra.mxu0 0.0
        %289 = vmatprep.subr.mxu0 0.0
        %290 = vmatpush1.msra.mxu0 0.0
        %291 = vmatprep.subr.mxu0 0.0
        %292 = vmatpush1.msra.mxu0 0.0
        %293 = vmatprep.subr.mxu0 0.0
        %294 = vmatpush1.msra.mxu0 0.0
        %295 = vmatprep.subr.mxu0 0.0
        %296 = vmatpush1.msra.mxu0 0.0
        %297 = vmatprep.subr.mxu0 0.0
        %298 = vmatpush1.msra.mxu0 0.0
        %299 = vmatprep.subr.mxu0 0.0
        %300 = vmatpush1.msra.mxu0 0.0
        %301 = vmatprep.subr.mxu0 %v269
        %302 = vmatpush1.msra.mxu0 %v267
        %303 = vmatprep.subr.mxu0 0.0
        %304 = vmatpush2.msra.mxu0 0.0
        %305 = vmatprep.subr.mxu0 0.0
        %306 = vmatpush2.msra.mxu0 0.0
        %307 = vmatprep.subr.mxu0 0.0
        %308 = vmatpush2.msra.mxu0 0.0
        %309 = vmatprep.subr.mxu0 0.0
        %310 = vmatpush2.msra.mxu0 0.0
        %311 = vmatprep.subr.mxu0 0.0
        %312 = vmatpush2.msra.mxu0 0.0
        %313 = vmatprep.subr.mxu0 0.0
        %314 = vmatpush2.msra.mxu0 0.0
        %315 = vmatprep.subr.mxu0 0.0
        %316 = vmatpush2.msra.mxu0 0.0
        %317 = vmatprep.subr.mxu0 0.0
        %318 = vmatpush2.msra.mxu0 0.0
        %319 = vmatprep.subr.mxu0 0.0
        %320 = vmatpush2.msra.mxu0 0.0
        %321 = vmatprep.subr.mxu0 0.0
        %322 = vmatpush2.msra.mxu0 0.0
        %323 = vmatprep.subr.mxu0 0.0
        %324 = vmatpush2.msra.mxu0 0.0
        %325 = vmatprep.subr.mxu0 0.0
        %326 = vmatpush2.msra.mxu0 0.0
        %327 = vmatprep.subr.mxu0 0.0
        %328 = vmatpush2.msra.mxu0 0.0
        %329 = vmatprep.subr.mxu0 0.0
        %330 = vmatpush2.msra.mxu0 0.0
        %331 = vmatprep.subr.mxu0 0.0
        %332 = vmatpush2.msra.mxu0 0.0
        %333 = vmatprep.subr.mxu0 0.0
        %334 = vmatpush2.msra.mxu0 0.0
        %335 = vmatprep.mubr.f32.mxu0 0.0
        %336 = vmatmul.mubr.f32.gmra.mxu0 %v255
        %v337 = vpop.f32.mrf.mxu0
        %v338 = vadd.f32 %v234, %v337
        %v339 = vpop.f32.mrf.mxu0
        %v340 = vadd.f32 %v234, %v339
        %341 = vmatprep.mubr.f32.mxu0 0.0
        %342 = vmatmul.mubr.f32.gmra.mxu0 %v258
        %v343 = vpop.f32.mrf.mxu0
        %v344 = vadd.f32 %v239, %v343
        %v345 = vpop.f32.mrf.mxu0
        %v346 = vadd.f32 %v239, %v345
        %347 = vmatprep.mubr.f32.mxu0 0.0
        %348 = vmatmul.mubr.f32.gmra.mxu0 %v261
        %v349 = vpop.f32.mrf.mxu0
        %v350 = vadd.f32 %v244, %v349
        %v351 = vpop.f32.mrf.mxu0
        %v352 = vadd.f32 %v244, %v351
        %353 = vmatprep.mubr.f32.mxu0 0.0
        %354 = vmatmul.mubr.f32.gmra.mxu0 %v264
        %v355 = vpop.f32.mrf.mxu0
        %v356 = vadd.f32 %v249, %v355
        %v357 = vpop.f32.mrf.mxu0
        %v358 = vadd.f32 %v249, %v357
        %359 = vdwg.mxu0
        %v360 = vmax.f32 %v338, 0.0
        %v361 = vmax.f32 %v340, 0.0
        %v362 = vmax.f32 %v344, 0.0
        %v363 = vmax.f32 %v346, 0.0
        %v364 = vmax.f32 %v350, 0.0
        %v365 = vmax.f32 %v352, 0.0
        %v366 = vmax.f32 %v356, 0.0
        %v367 = vmax.f32 %v358, 0.0
        %v368 = vld [vmem:[%s3] sm:$0xff]
        %v369 = vld [vmem:[%s3 + $0x8] sm:$0xf]
        %v370 = vld [vmem:[%s4] sm:$0xff]
        %v371 = vld [vmem:[%s4 + $0x8] sm:$0xf]
        %373 = vset.pattern.permute.xlu0 0
        %374 = vperm.xlu0 %373, %v370
        %v375 = vpop.permute.xlu0 %374
        %378 = vset.pattern.permute.xlu0 0
        %379 = vperm.xlu0 %378, %v371
        %v380 = vpop.permute.xlu0 %379
        %vm382 = vcmask 261120
        %v384 = vsel %vm382, %v368, 0
        %v387 = vsel %vm382, %v369, 0
        %389 = vmatprep.subr.mxu0 0.0
        %390 = vmatpush1.msra.mxu0 0.0
        %391 = vmatprep.subr.mxu0 0.0
        %392 = vmatpush1.msra.mxu0 0.0
        %393 = vmatprep.subr.mxu0 0.0
        %394 = vmatpush1.msra.mxu0 0.0
        %395 = vmatprep.subr.mxu0 0.0
        %396 = vmatpush1.msra.mxu0 0.0
        %397 = vmatprep.subr.mxu0 0.0
        %398 = vmatpush1.msra.mxu0 0.0
        %399 = vmatprep.subr.mxu0 0.0
        %400 = vmatpush1.msra.mxu0 0.0
        %401 = vmatprep.subr.mxu0 0.0
        %402 = vmatpush1.msra.mxu0 0.0
        %403 = vmatprep.subr.mxu0 0.0
        %404 = vmatpush1.msra.mxu0 0.0
        %405 = vmatprep.subr.mxu0 0.0
        %406 = vmatpush1.msra.mxu0 0.0
        %407 = vmatprep.subr.mxu0 0.0
        %408 = vmatpush1.msra.mxu0 0.0
        %409 = vmatprep.subr.mxu0 0.0
        %410 = vmatpush1.msra.mxu0 0.0
        %411 = vmatprep.subr.mxu0 0.0
        %412 = vmatpush1.msra.mxu0 0.0
        %413 = vmatprep.subr.mxu0 %v367
        %414 = vmatpush1.msra.mxu0 %v366
        %415 = vmatprep.subr.mxu0 %v365
        %416 = vmatpush1.msra.mxu0 %v364
        %417 = vmatprep.subr.mxu0 %v363
        %418 = vmatpush1.msra.mxu0 %v362
        %419 = vmatprep.subr.mxu0 %v361
        %420 = vmatpush1.msra.mxu0 %v360
        %421 = vmatprep.subr.mxu0 0.0
        %422 = vmatpush2.msra.mxu0 0.0
        %423 = vmatprep.subr.mxu0 0.0
        %424 = vmatpush2.msra.mxu0 0.0
        %425 = vmatprep.subr.mxu0 0.0
        %426 = vmatpush2.msra.mxu0 0.0
        %427 = vmatprep.subr.mxu0 0.0
        %428 = vmatpush2.msra.mxu0 0.0
        %429 = vmatprep.subr.mxu0 0.0
        %430 = vmatpush2.msra.mxu0 0.0
        %431 = vmatprep.subr.mxu0 0.0
        %432 = vmatpush2.msra.mxu0 0.0
        %433 = vmatprep.subr.mxu0 0.0
        %434 = vmatpush2.msra.mxu0 0.0
        %435 = vmatprep.subr.mxu0 0.0
        %436 = vmatpush2.msra.mxu0 0.0
        %437 = vmatprep.subr.mxu0 0.0
        %438 = vmatpush2.msra.mxu0 0.0
        %439 = vmatprep.subr.mxu0 0.0
        %440 = vmatpush2.msra.mxu0 0.0
        %441 = vmatprep.subr.mxu0 0.0
        %442 = vmatpush2.msra.mxu0 0.0
        %443 = vmatprep.subr.mxu0 0.0
        %444 = vmatpush2.msra.mxu0 0.0
        %445 = vmatprep.subr.mxu0 0.0
        %446 = vmatpush2.msra.mxu0 0.0
        %447 = vmatprep.subr.mxu0 0.0
        %448 = vmatpush2.msra.mxu0 0.0
        %449 = vmatprep.subr.mxu0 0.0
        %450 = vmatpush2.msra.mxu0 0.0
        %451 = vmatprep.subr.mxu0 0.0
        %452 = vmatpush2.msra.mxu0 0.0
        %453 = vmatprep.mubr.f32.mxu0 0.0
        %454 = vmatmul.mubr.f32.gmra.mxu0 %v384
        %v455 = vpop.f32.mrf.mxu0
        %v456 = vadd.f32 %v375, %v455
        %v457 = vpop.f32.mrf.mxu0
        %v458 = vadd.f32 %v375, %v457
        %459 = vmatprep.mubr.f32.mxu0 0.0
        %460 = vmatmul.mubr.f32.gmra.mxu0 %v387
        %v461 = vpop.f32.mrf.mxu0
        %v462 = vadd.f32 %v380, %v461
        %v463 = vpop.f32.mrf.mxu0
        %v464 = vadd.f32 %v380, %v463
        %465 = vdwg.mxu0
        %v466 = vrot.slane %v456, 4
        %v467 = vmax.f32 %v456, %v466
        %v468 = vrot.slane %v467, 2
        %v469 = vmax.f32 %v467, %v468
        %v470 = vrot.slane %v469, 1
        %v471 = vmax.f32 %v469, %v470
        %v472 = vrot.slane %v458, 4
        %v473 = vmax.f32 %v458, %v472
        %v474 = vrot.slane %v473, 2
        %v475 = vmax.f32 %v473, %v474
        %v476 = vrot.slane %v475, 1
        %v477 = vmax.f32 %v475, %v476
        %v478 = vsub.f32 %v456, %v471
        %v479 = vsub.f32 %v458, %v477
        %v480 = vmul.f32 %v478, 1.442695
        %v481 = vpow.pop %v480
        %v482 = vmul.f32 %v479, 1.442695
        %v483 = vpow.pop %v482
        %v484 = vrot.slane %v481, 4
        %v485 = vadd.f32 %v481, %v484
        %v486 = vrot.slane %v485, 2
        %v487 = vadd.f32 %v485, %v486
        %v488 = vrot.slane %v487, 1
        %v489 = vadd.f32 %v487, %v488
        %v490 = vrot.slane %v483, 4
        %v491 = vadd.f32 %v483, %v490
        %v492 = vrot.slane %v491, 2
        %v493 = vadd.f32 %v491, %v492
        %v494 = vrot.slane %v493, 1
        %v495 = vadd.f32 %v493, %v494
        %v496 = vrcp.pop %v489
        %v497 = vrcp.pop %v495
        %v498 = vmul.f32 %v481, %v496
        %v499 = vmul.f32 %v483, %v497
        %500 = vst [vmem:[%s214] sm:$0xff] %v456
        %501 = vst [vmem:[%s214 + $0x8] sm:$0xff] %v458
        %502 = vst [vmem:[%s214 + $0x10] sm:$0xff] %v498
        %503 = vst [vmem:[%s214 + $0x18] sm:$0xff] %v499
        %504 = vst [vmem:[%s214 + $0x20] sm:$0xf] %v462
        %505 = vst [vmem:[%s214 + $0x28] sm:$0xf] %v464
        %s506 = sand.u32 %s134, 1
        %s507 = sand.u32 %s134, 1
        %s508 = smul.addr %s507, 48
        %s509 = scalar_lea.vmem [#allocation2], %s508
        // Predicated region
        $region41: #{panoptic_deeplab_forward.1} parent=39 // pred_check
          %p510 = pneg %p144
        $region42: #{panoptic_deeplab_forward.1} parent=39 // pred_check_branch
          %512 = sbr.rel (%p510) target = $region44
        $region43: #{panoptic_deeplab_forward.1} parent=39 // pred_region
          %s513 = smul.u32 2, %s16
          %s514 = smul.addr %s513, 8
          %s515 = scalar_lea.vmem %s5, %s514
          // Predicated region
          $region45: #{panoptic_deeplab_forward.1} parent=43 // pred_check
            _
          $region46: #{panoptic_deeplab_forward.1} parent=43 // pred_check_branch
            %517 = sbr.rel (0) target = $region48
          $region47: #{panoptic_deeplab_forward.1} parent=43 // pred_region
            // Predicated region
            $region49: #{panoptic_deeplab_forward.1} parent=47 // pred_check
              _
            $region50: #{panoptic_deeplab_forward.1} parent=47 // pred_check_branch
              %519 = sbr.rel (0) target = $region52
            $region51: #{panoptic_deeplab_forward.1} parent=47 // pred_region
              loop: start=0, step=1, limit=1
              $region53: #{panoptic_deeplab_forward.1} parent=51 // loop_pre_header
                _
              $region54: #{panoptic_deeplab_forward.1} parent=51 // loop_header
                %s521 = sphi 0, %s525
                %p522 = scmp.ge.s32.totalorder %s521, 1
                %s526 = sphi %s509, %s509
                %s527 = sphi %s515, %s515
              $region55: #{panoptic_deeplab_forward.1} parent=51 // loop_header_branch
                %524 = sbr.rel (%p522) target = $region59
              $region56: #{panoptic_deeplab_forward.1} parent=51 // loop_body
                %v528 = vld [vmem:[%s526] sm:$0xff]
                %529 = vst [vmem:[%s527] sm:$0xff] %v528
                %v530 = vld [vmem:[%s526 + $0x8] sm:$0xff]
                %531 = vst [vmem:[%s527 + $0x8] sm:$0xff] %v530
                %v532 = vld [vmem:[%s526 + $0x10] sm:$0xff]
                %533 = vst [vmem:[%s527 + $0x20] sm:$0xff] %v532
                %v534 = vld [vmem:[%s526 + $0x18] sm:$0xff]
                %535 = vst [vmem:[%s527 + $0x28] sm:$0xff] %v534
                %v536 = vld [vmem:[%s526 + $0x20] sm:$0xff]
                %537 = vst [vmem:[%s527 + $0x40] sm:$0xff] %v536
                %v538 = vld [vmem:[%s526 + $0x28] sm:$0xff]
                %539 = vst [vmem:[%s527 + $0x48] sm:$0xff] %v538
              $region57: #{panoptic_deeplab_forward.1} parent=51 // loop_footer
                %s525 = sadd.s32 1, %s521
              $region58: #{panoptic_deeplab_forward.1} parent=51 // loop_footer_branch
                %520 = sbr.rel target = $region54
              $region59: #{panoptic_deeplab_forward.1} parent=51 // loop_exit
                _
            $region52: #{panoptic_deeplab_forward.1} parent=47 // pred_fallthru
              _
            // Predicated region
            $region60: #{panoptic_deeplab_forward.1} parent=47 // pred_check
              _
            $region61: #{panoptic_deeplab_forward.1} parent=47 // pred_check_branch
              %541 = sbr.rel target = $region63
            $region62: #{panoptic_deeplab_forward.1} parent=47 // pred_region
              _
            $region63: #{panoptic_deeplab_forward.1} parent=47 // pred_fallthru
              _
          $region48: #{panoptic_deeplab_forward.1} parent=43 // pred_fallthru
            _
          %542 = vnop
        $region44: #{panoptic_deeplab_forward.1} parent=39 // pred_fallthru
          _
      $region40: #{panoptic_deeplab_forward.1} parent=5 // pred_fallthru
        _
      %p543 = scmp.le.s32.totalorder 2, %s11
      // Predicated region
      $region64: #{panoptic_deeplab_forward.1} parent=5 // pred_check
        %p544 = pneg %p543
      $region65: #{panoptic_deeplab_forward.1} parent=5 // pred_check_branch
        %546 = sbr.rel (%p544) target = $region67
      $region66: #{panoptic_deeplab_forward.1} parent=5 // pred_region
        %s547 = ssub.s32 %s11, 2
        // Predicated region
        $region68: #{panoptic_deeplab_forward.1} parent=66 // pred_check
          %p548 = pneg %p150
        $region69: #{panoptic_deeplab_forward.1} parent=66 // pred_check_branch
          %550 = sbr.rel (%p548) target = $region71
        $region70: #{panoptic_deeplab_forward.1} parent=66 // pred_region
          %s551 = sand.u32 %s135, 1
          %s552 = sand.u32 %s135, 1
          %s553 = smul.addr %s552, 48
          %s554 = scalar_lea.vmem [#allocation2], %s553
        $region71: #{panoptic_deeplab_forward.1} parent=66 // pred_fallthru
          _
      $region67: #{panoptic_deeplab_forward.1} parent=5 // pred_fallthru
        _
    $region6: #{panoptic_deeplab_forward.1} parent=1 // loop_footer
      %s15 = sadd.s32 1, %s11
    $region7: #{panoptic_deeplab_forward.1} parent=1 // loop_footer_branch
      %10 = sbr.rel target = $region3
    $region8: #{panoptic_deeplab_forward.1} parent=1 // loop_exit
      _

</llo_original>
